<compile_context>
chip_gen: v7x
topology: tpu7x:2x2x1
jax: 0.10.0
libtpu: 0.0.40
codegen_flags: <defaults>
</compile_context>

<pallas_src>
import jax
import jax.numpy as jnp
from jax import lax
from jax.experimental import pallas as pl
from jax.experimental.pallas import tpu as pltpu


def _round_up(n, m):
    return ((n + m - 1) // m) * m


def simple_rnn_forward(x, params, *, time_block=None):
    """x: (B, T, input_size) float32 -> (B, num_classes) float32."""
    w_ih, w_hh, b_ih, b_hh, w_fc, b_fc = (
        params["w_ih"], params["w_hh"], params["b_ih"],
        params["b_hh"], params["w_fc"], params["b_fc"],
    )
    B, T, I = x.shape
    H = w_ih.shape[0]
    C = w_fc.shape[0]

    LANE = 128
    SUB = 8
    Bp = _round_up(B, SUB)       # sublane-aligned batch
    Ip = _round_up(I, LANE)
    Hp = _round_up(H, LANE)
    Cp = _round_up(C, LANE)

    # ---- time-block selection ----------------------------------------------------
    if time_block is None:
        # ~4 MiB per x buffer (bf16, double-buffered by the pipeline), and prefer
        # n_blocks >= 2 so the next x block prefetches behind the serial recurrence.
        budget = 4 << 20
        Tt = max(1, min(T, budget // (Bp * Ip * 2)))
        if Tt == T and T > 1:
            Tt = (T + 1) // 2
        while T % Tt != 0:
            Tt -= 1
    else:
        Tt = time_block
        assert T % Tt == 0, "time_block must divide T"
    n_blocks = T // Tt

    # ---- glue (tiny XLA ops, outside the kernel) ----------------------------------
    # bf16 cast first (halves transpose bytes), then time-major + batch/lane padding.
    x_bf = x.astype(jnp.bfloat16)
    x_tm = jnp.transpose(x_bf, (1, 0, 2))                       # (T, B, I)
    x_tm = jnp.pad(x_tm, ((0, 0), (0, Bp - B), (0, Ip - I)))    # (T, Bp, Ip)
    x_tm = x_tm.reshape(T * Bp, Ip)

    wih_t = jnp.pad(w_ih.T, ((0, Ip - I), (0, Hp - H))).astype(jnp.bfloat16)
    whh_t = jnp.pad(w_hh.T, ((0, Hp - H), (0, Hp - H))).astype(jnp.bfloat16)
    bias = jnp.pad(b_ih + b_hh, (0, Hp - H)).reshape(1, Hp).astype(jnp.float32)
    wfc_t = jnp.pad(w_fc.T, ((0, Hp - H), (0, Cp - C))).astype(jnp.bfloat16)
    bfc = jnp.pad(b_fc, (0, Cp - C)).reshape(1, Cp).astype(jnp.float32)

    def kernel(x_ref, wih_ref, whh_ref, b_ref, wfc_ref, bfc_ref, out_ref,
               xw_ref, h_ref):
        s = pl.program_id(0)

        # h_0 = 0 (f32 hidden-state carry persists in VMEM scratch across time blocks).
        @pl.when(s == 0)
        def _():
            h_ref[...] = jnp.zeros_like(h_ref)

        # Phase 1 (off the serial chain): hoisted input projection for all Tt steps of
        # this block as one bf16 MXU GEMM (f32 accumulation), staged in VMEM scratch.
        # Rows are time-major: rows [tt*Bp, (tt+1)*Bp) belong to step tt.
        xw_ref[...] = (
            jnp.dot(x_ref[...], wih_ref[...], preferred_element_type=jnp.float32)
            + b_ref[...]
        )

        # Phase 2 (serial recurrence): only h @ W_hh^T + tanh per step, with aligned
        # whole-tile slices of the staged projection.
        whh = whh_ref[...]

        def step(row_start, h):
            pre = xw_ref[pl.ds(row_start, Bp), :] + jnp.dot(
                h.astype(jnp.bfloat16), whh, preferred_element_type=jnp.float32
            )
            return jnp.tanh(pre)            # f32 tanh (EUP), f32 carry

        h = h_ref[...]
        if Tt <= 16:
            for tt in range(Tt):            # fully unrolled; Tt is small and static
                h = step(tt * Bp, h)
        else:
            # Moderate unroll: LLO visibility without blowing up vreg pressure.
            h = lax.fori_loop(
                0, Tt,
                lambda tt, hh: step(pl.multiple_of(tt * Bp, SUB), hh),
                h, unroll=8,
            )
        h_ref[...] = h

        # Phase 3: fused fc head on the final hidden state (lane-dense Cp output).
        @pl.when(s == pl.num_programs(0) - 1)
        def _():
            out_ref[...] = (
                jnp.dot(h.astype(jnp.bfloat16), wfc_ref[...],
                        preferred_element_type=jnp.float32)
                + bfc_ref[...]
            ).astype(out_ref.dtype)

    # ---- VMEM budget (binding constraint is v7x: 64 MiB physical) -----------------
    est = (
        2 * Tt * Bp * Ip * 2                              # x block, bf16, double-buffered
        + 2 * (Ip * Hp + Hp * Hp + Hp * Cp) * 2           # weights, bf16, double-buffered
        + 2 * (Hp + Cp) * 4                               # biases
        + 2 * Bp * Cp * 4                                 # output block
        + Tt * Bp * Hp * 4                                # xw staging scratch
        + Bp * Hp * 4                                     # h carry scratch
    )
    vmem_limit = int(min(64 << 20, max(16 << 20, 2 * est)))

    out_padded = pl.pallas_call(
        kernel,
        out_shape=jax.ShapeDtypeStruct((Bp, Cp), jnp.float32),
        grid_spec=pltpu.PrefetchScalarGridSpec(
            num_scalar_prefetch=0,
            grid=(n_blocks,),
            in_specs=[
                pl.BlockSpec((Tt * Bp, Ip), lambda s: (s, 0)),   # x rows for block s
                pl.BlockSpec((Ip, Hp), lambda s: (0, 0)),        # W_ih^T (constant)
                pl.BlockSpec((Hp, Hp), lambda s: (0, 0)),        # W_hh^T (constant)
                pl.BlockSpec((1, Hp), lambda s: (0, 0)),         # b_ih + b_hh
                pl.BlockSpec((Hp, Cp), lambda s: (0, 0)),        # W_fc^T (constant)
                pl.BlockSpec((1, Cp), lambda s: (0, 0)),         # fc bias
            ],
            out_specs=pl.BlockSpec((Bp, Cp), lambda s: (0, 0)),  # resident output
            scratch_shapes=[
                pltpu.VMEM((Tt * Bp, Hp), jnp.float32),          # xw staging
                pltpu.VMEM((Bp, Hp), jnp.float32),               # hidden-state carry
            ],
        ),
        compiler_params=pltpu.CompilerParams(
            dimension_semantics=("arbitrary",),                  # time blocks are serial
            vmem_limit_bytes=vmem_limit,
        ),
    )(x_tm, wih_t, whh_t, bias, wfc_t, bfc)

    # Slice off padded batch rows and padded class lanes.
    return out_padded[:B, :C]


def init_params(key, input_size, hidden_size, num_classes):
    """Deterministic init matching PyTorch parameter shapes (U(-1/sqrt(H), 1/sqrt(H)))."""
    ks = jax.random.split(key, 6)
    s = 1.0 / jnp.sqrt(jnp.float32(hidden_size))
    u = lambda k, shape: jax.random.uniform(k, shape, jnp.float32, -s, s)
    return {
        "w_ih": u(ks[0], (hidden_size, input_size)),
        "w_hh": u(ks[1], (hidden_size, hidden_size)),
        "b_ih": u(ks[2], (hidden_size,)),
        "b_hh": u(ks[3], (hidden_size,)),
        "w_fc": u(ks[4], (num_classes, hidden_size)),
        "b_fc": u(ks[5], (num_classes,)),
    }


def reference_forward(x, p):
    """Pure-JAX f32 reference of the PyTorch forward semantics."""
    B, T, I = x.shape
    H = p["w_ih"].shape[0]
    h = jnp.zeros((B, H), jnp.float32)
    for t in range(T):
        h = jnp.tanh(x[:, t, :] @ p["w_ih"].T + p["b_ih"] + h @ p["w_hh"].T + p["b_hh"])
    return h @ p["w_fc"].T + p["b_fc"]


if __name__ == "__main__":
    B, T, INPUT, HIDDEN, CLASSES = 2, 8, 16, 32, 4

    key = jax.random.PRNGKey(0)
    kx, kp = jax.random.split(key)
    x = jax.random.normal(kx, (B, T, INPUT), jnp.float32)
    params = init_params(kp, INPUT, HIDDEN, CLASSES)

    ref = reference_forward(x, params)

    # Default: auto time_block -> 2 grid steps, x prefetch hidden behind the recurrence.
    out = jax.block_until_ready(simple_rnn_forward(x, params))
    assert out.shape == (B, CLASSES)
    # bf16 matmul inputs with f32 accumulation vs. pure-f32 reference -> loose tol.
    # TODO(synk): for long sequences validate bf16-recurrence drift or keep W_hh in f32.
    assert jnp.allclose(out, ref, atol=5e-2, rtol=5e-2), (out, ref)

    # Also exercise the single-block path (whole sequence in one grid step).
    out_single = jax.block_until_ready(simple_rnn_forward(x, params, time_block=T))
    assert jnp.allclose(out_single, ref, atol=5e-2, rtol=5e-2), (out_single, ref)

    # And a finer blocking (Tt=2, 4 grid steps).
    out_blocked = jax.block_until_ready(simple_rnn_forward(x, params, time_block=2))
    assert jnp.allclose(out_blocked, ref, atol=5e-2, rtol=5e-2), (out_blocked, ref)

    print("KERNEL_OK")
</pallas_src>

<mosaic_0001>
module attributes {stable_mosaic.version = 11 : i64} {
  func.func @kernel(%arg0: i32, %arg1: memref<32x128xbf16, #tpu.memory_space<vmem>>, %arg2: memref<128x128xbf16, #tpu.memory_space<vmem>>, %arg3: memref<128x128xbf16, #tpu.memory_space<vmem>>, %arg4: memref<1x128xf32, #tpu.memory_space<vmem>>, %arg5: memref<128x128xbf16, #tpu.memory_space<vmem>>, %arg6: memref<1x128xf32, #tpu.memory_space<vmem>>, %arg7: memref<8x128xf32, #tpu.memory_space<vmem>>, %arg8: memref<32x128xf32, #tpu.memory_space<vmem>>, %arg9: memref<8x128xf32, #tpu.memory_space<vmem>>) attributes {dimension_semantics = [#tpu.dimension_semantics<arbitrary>], iteration_bounds = array<i64: 2>, scalar_prefetch = 0 : i64, scratch_operands = 2 : i64, tpu.core_type = #tpu.core_type<tc>, window_params = [{transform_indices = @transform_0, window_bounds = array<i64: 32, 128>}, {pipeline_mode = #tpu.pipeline_mode<synchronous>, transform_indices = @transform_1, window_bounds = array<i64: 128, 128>}, {pipeline_mode = #tpu.pipeline_mode<synchronous>, transform_indices = @transform_2, window_bounds = array<i64: 128, 128>}, {pipeline_mode = #tpu.pipeline_mode<synchronous>, transform_indices = @transform_3, window_bounds = array<i64: 1, 128>}, {pipeline_mode = #tpu.pipeline_mode<synchronous>, transform_indices = @transform_4, window_bounds = array<i64: 128, 128>}, {pipeline_mode = #tpu.pipeline_mode<synchronous>, transform_indices = @transform_5, window_bounds = array<i64: 1, 128>}, {pipeline_mode = #tpu.pipeline_mode<synchronous>, transform_indices = @transform_6, window_bounds = array<i64: 8, 128>}]} {
    %c0_i32 = arith.constant 0 : i32
    %0 = arith.cmpi eq, %arg0, %c0_i32 : i32
    %1 = arith.extui %0 : i1 to i32
    %c0_i32_0 = arith.constant 0 : i32
    %2 = arith.cmpi ne, %1, %c0_i32_0 : i32
    scf.if %2 {
      %cst_24 = arith.constant 0.000000e+00 : f32
      %36 = vector.broadcast %cst_24 : f32 to vector<8x128xf32>
      %c0_25 = arith.constant 0 : index
      %c0_26 = arith.constant 0 : index
      %37 = vector.load %arg9[%c0_25, %c0_26] : memref<8x128xf32, #tpu.memory_space<vmem>>, vector<8x128xf32>
      tpu.vector_store %arg9[%c0_25, %c0_26], %36 {strides = array<i32>} : memref<8x128xf32, #tpu.memory_space<vmem>>, vector<8x128xf32>,
    } else {
    }
    %c0 = arith.constant 0 : index
    %c0_1 = arith.constant 0 : index
    %3 = vector.load %arg1[%c0, %c0_1] : memref<32x128xbf16, #tpu.memory_space<vmem>>, vector<32x128xbf16>
    %c0_2 = arith.constant 0 : index
    %c0_3 = arith.constant 0 : index
    %4 = vector.load %arg2[%c0_2, %c0_3] : memref<128x128xbf16, #tpu.memory_space<vmem>>, vector<128x128xbf16>
    %cst = arith.constant dense<0.000000e+00> : vector<32x128xf32>
    %5 = tpu.matmul %3, %4, %cst {dimension_numbers = #tpu.dot_dimension_numbers<[1], [0], [0], [1], [0, 0, 1, 1], [], []>} : vector<32x128xbf16>, vector<128x128xbf16>, vector<32x128xf32> -> vector<32x128xf32>
    %c0_4 = arith.constant 0 : index
    %c0_5 = arith.constant 0 : index
    %6 = vector.load %arg4[%c0_4, %c0_5] : memref<1x128xf32, #tpu.memory_space<vmem>>, vector<1x128xf32>
    %7 = vector.broadcast %6 : vector<1x128xf32> to vector<32x128xf32>
    %8 = arith.addf %5, %7 : vector<32x128xf32>
    %c0_6 = arith.constant 0 : index
    %c0_7 = arith.constant 0 : index
    %9 = vector.load %arg8[%c0_6, %c0_7] : memref<32x128xf32, #tpu.memory_space<vmem>>, vector<32x128xf32>
    tpu.vector_store %arg8[%c0_6, %c0_7], %8 {strides = array<i32>} : memref<32x128xf32, #tpu.memory_space<vmem>>, vector<32x128xf32>,
    %c0_8 = arith.constant 0 : index
    %c0_9 = arith.constant 0 : index
    %10 = vector.load %arg3[%c0_8, %c0_9] : memref<128x128xbf16, #tpu.memory_space<vmem>>, vector<128x128xbf16>
    %c0_10 = arith.constant 0 : index
    %c0_11 = arith.constant 0 : index
    %11 = vector.load %arg9[%c0_10, %c0_11] : memref<8x128xf32, #tpu.memory_space<vmem>>, vector<8x128xf32>
    %c0_12 = arith.constant 0 : index
    %c0_13 = arith.constant 0 : index
    %12 = vector.load %arg8[%c0_12, %c0_13] : memref<32x128xf32, #tpu.memory_space<vmem>>, vector<8x128xf32>
    %13 = arith.truncf %11 : vector<8x128xf32> to vector<8x128xbf16>
    %cst_14 = arith.constant dense<0.000000e+00> : vector<8x128xf32>
    %14 = tpu.matmul %13, %10, %cst_14 {dimension_numbers = #tpu.dot_dimension_numbers<[1], [0], [0], [1], [0, 0, 1, 1], [], []>} : vector<8x128xbf16>, vector<128x128xbf16>, vector<8x128xf32> -> vector<8x128xf32>
    %15 = arith.addf %12, %14 : vector<8x128xf32>
    %16 = math.tanh %15 : vector<8x128xf32>
    %c8 = arith.constant 8 : index
    %c0_15 = arith.constant 0 : index
    %17 = vector.load %arg8[%c8, %c0_15] : memref<32x128xf32, #tpu.memory_space<vmem>>, vector<8x128xf32>
    %18 = arith.truncf %16 : vector<8x128xf32> to vector<8x128xbf16>
    %cst_16 = arith.constant dense<0.000000e+00> : vector<8x128xf32>
    %19 = tpu.matmul %18, %10, %cst_16 {dimension_numbers = #tpu.dot_dimension_numbers<[1], [0], [0], [1], [0, 0, 1, 1], [], []>} : vector<8x128xbf16>, vector<128x128xbf16>, vector<8x128xf32> -> vector<8x128xf32>
    %20 = arith.addf %17, %19 : vector<8x128xf32>
    %21 = math.tanh %20 : vector<8x128xf32>
    %c16 = arith.constant 16 : index
    %c0_17 = arith.constant 0 : index
    %22 = vector.load %arg8[%c16, %c0_17] : memref<32x128xf32, #tpu.memory_space<vmem>>, vector<8x128xf32>
    %23 = arith.truncf %21 : vector<8x128xf32> to vector<8x128xbf16>
    %cst_18 = arith.constant dense<0.000000e+00> : vector<8x128xf32>
    %24 = tpu.matmul %23, %10, %cst_18 {dimension_numbers = #tpu.dot_dimension_numbers<[1], [0], [0], [1], [0, 0, 1, 1], [], []>} : vector<8x128xbf16>, vector<128x128xbf16>, vector<8x128xf32> -> vector<8x128xf32>
    %25 = arith.addf %22, %24 : vector<8x128xf32>
    %26 = math.tanh %25 : vector<8x128xf32>
    %c24 = arith.constant 24 : index
    %c0_19 = arith.constant 0 : index
    %27 = vector.load %arg8[%c24, %c0_19] : memref<32x128xf32, #tpu.memory_space<vmem>>, vector<8x128xf32>
    %28 = arith.truncf %26 : vector<8x128xf32> to vector<8x128xbf16>
    %cst_20 = arith.constant dense<0.000000e+00> : vector<8x128xf32>
    %29 = tpu.matmul %28, %10, %cst_20 {dimension_numbers = #tpu.dot_dimension_numbers<[1], [0], [0], [1], [0, 0, 1, 1], [], []>} : vector<8x128xbf16>, vector<128x128xbf16>, vector<8x128xf32> -> vector<8x128xf32>
    %30 = arith.addf %27, %29 : vector<8x128xf32>
    %31 = math.tanh %30 : vector<8x128xf32>
    %c0_21 = arith.constant 0 : index
    %c0_22 = arith.constant 0 : index
    %32 = vector.load %arg9[%c0_21, %c0_22] : memref<8x128xf32, #tpu.memory_space<vmem>>, vector<8x128xf32>
    tpu.vector_store %arg9[%c0_21, %c0_22], %31 {strides = array<i32>} : memref<8x128xf32, #tpu.memory_space<vmem>>, vector<8x128xf32>,
    %c1_i32 = arith.constant 1 : i32
    %33 = arith.cmpi eq, %arg0, %c1_i32 : i32
    %34 = arith.extui %33 : i1 to i32
    %c0_i32_23 = arith.constant 0 : i32
    %35 = arith.cmpi ne, %34, %c0_i32_23 : i32
    scf.if %35 {
      %36 = arith.truncf %31 : vector<8x128xf32> to vector<8x128xbf16>
      %c0_24 = arith.constant 0 : index
      %c0_25 = arith.constant 0 : index
      %37 = vector.load %arg5[%c0_24, %c0_25] : memref<128x128xbf16, #tpu.memory_space<vmem>>, vector<128x128xbf16>
      %cst_26 = arith.constant dense<0.000000e+00> : vector<8x128xf32>
      %38 = tpu.matmul %36, %37, %cst_26 {dimension_numbers = #tpu.dot_dimension_numbers<[1], [0], [0], [1], [0, 0, 1, 1], [], []>} : vector<8x128xbf16>, vector<128x128xbf16>, vector<8x128xf32> -> vector<8x128xf32>
      %c0_27 = arith.constant 0 : index
      %c0_28 = arith.constant 0 : index
      %39 = vector.load %arg6[%c0_27, %c0_28] : memref<1x128xf32, #tpu.memory_space<vmem>>, vector<1x128xf32>
      %40 = vector.broadcast %39 : vector<1x128xf32> to vector<8x128xf32>
      %41 = arith.addf %38, %40 : vector<8x128xf32>
      %c0_29 = arith.constant 0 : index
      %c0_30 = arith.constant 0 : index
      %42 = vector.load %arg7[%c0_29, %c0_30] : memref<8x128xf32, #tpu.memory_space<vmem>>, vector<8x128xf32>
      tpu.vector_store %arg7[%c0_29, %c0_30], %41 {strides = array<i32>} : memref<8x128xf32, #tpu.memory_space<vmem>>, vector<8x128xf32>,
    } else {
    }
    return
  }
  func.func @transform_0(%arg0: i32) -> (i32, i32) {
    %c0_i32 = arith.constant 0 : i32
    %c0_i32_0 = arith.constant 0 : i32
    return %arg0, %c0_i32 : i32, i32
  }
  func.func @transform_1(%arg0: i32) -> (i32, i32) {
    %c0_i32 = arith.constant 0 : i32
    %c0_i32_0 = arith.constant 0 : i32
    %c0_i32_1 = arith.constant 0 : i32
    return %c0_i32, %c0_i32_0 : i32, i32
  }
  func.func @transform_2(%arg0: i32) -> (i32, i32) {
    %c0_i32 = arith.constant 0 : i32
    %c0_i32_0 = arith.constant 0 : i32
    %c0_i32_1 = arith.constant 0 : i32
    return %c0_i32, %c0_i32_0 : i32, i32
  }
  func.func @transform_3(%arg0: i32) -> (i32, i32) {
    %c0_i32 = arith.constant 0 : i32
    %c0_i32_0 = arith.constant 0 : i32
    %c0_i32_1 = arith.constant 0 : i32
    return %c0_i32, %c0_i32_0 : i32, i32
  }
  func.func @transform_4(%arg0: i32) -> (i32, i32) {
    %c0_i32 = arith.constant 0 : i32
    %c0_i32_0 = arith.constant 0 : i32
    %c0_i32_1 = arith.constant 0 : i32
    return %c0_i32, %c0_i32_0 : i32, i32
  }
  func.func @transform_5(%arg0: i32) -> (i32, i32) {
    %c0_i32 = arith.constant 0 : i32
    %c0_i32_0 = arith.constant 0 : i32
    %c0_i32_1 = arith.constant 0 : i32
    return %c0_i32, %c0_i32_0 : i32, i32
  }
  func.func @transform_6(%arg0: i32) -> (i32, i32) {
    %c0_i32 = arith.constant 0 : i32
    %c0_i32_0 = arith.constant 0 : i32
    %c0_i32_1 = arith.constant 0 : i32
    return %c0_i32, %c0_i32_0 : i32, i32
  }
}

</mosaic_0001>

<llo_original>
// kernel: tpu_custom_call.1
$region0: #{tpu_custom_call.1}
  #allocation0 [shape = 'u32[]', space=smem, size = 0x4, offset = 0x4, fixed_abs, tag = 'smem constant byte address 0x4 - core index']
  #allocation1 [shape = 'u32[144,128]{1,0:T(1,128)}', space=vmem, size = 0x12000, scoped, tag = 'internal scratch']
  #allocation2 [shape = 'f32[32,128]{1,0:T(8,128)}', space=vmem, size = 0x4000, scoped, tag = 'scratch operand']
  #allocation3 [shape = 'f32[8,128]{1,0:T(8,128)}', space=vmem, size = 0x1000, scoped, tag = 'scratch operand']
  %s0 = inlined_call_operand.hbm [shape: bf16[64,128], index: 0, kind: input, shape index: {}]
  %s1 = inlined_call_operand.hbm [shape: bf16[128,128], index: 1, kind: input, shape index: {}]
  %s2 = inlined_call_operand.hbm [shape: bf16[128,128], index: 2, kind: input, shape index: {}]
  %s3 = inlined_call_operand.vmem [shape: f32[1,128], index: 3, kind: input, shape index: {}]
  %s4 = inlined_call_operand.hbm [shape: bf16[128,128], index: 4, kind: input, shape index: {}]
  %s5 = inlined_call_operand.vmem [shape: f32[1,128], index: 5, kind: input, shape index: {}]
  %s6 = inlined_call_operand.hbm [shape: f32[8,128], index: 6, kind: output, shape index: {}]
  %s7 = sld [smem:[#allocation0]]
  $region81: #{tpu_custom_call.1} parent=0
    _
  %s9 = ssub.s32 1, %s7
  %s10 = scalar_select 0, %s9, %s7
  $region1: #{tpu_custom_call.1} parent=0
    #allocation4 [shape = 'u8[16384]{0}', space=vmem, size = 0x4000, scoped, tag = 'input window, operand 0']
    #allocation5 [shape = 's32[2]{0}', space=sflag, size = 0x8, scoped, tag = 'scoped memory for tpu_custom_call.1']
    #allocation6 [shape = 's32[2]{0}', space=sflag, size = 0x8, scoped, tag = 'scoped memory for tpu_custom_call.1']
    #allocation7 [shape = 'u8[32768]{0}', space=vmem, size = 0x8000, scoped, tag = 'input window, operand 1, single buffered']
    #allocation8 [shape = 's32[1]{0}', space=sflag, size = 0x4, scoped, tag = 'scoped memory for tpu_custom_call.1']
    #allocation9 [shape = 'u8[32768]{0}', space=vmem, size = 0x8000, scoped, tag = 'input window, operand 2, single buffered']
    #allocation10 [shape = 'u8[32768]{0}', space=vmem, size = 0x8000, scoped, tag = 'input window, operand 4, single buffered']
    #allocation11 [shape = 's32[1]{0}', space=sflag, size = 0x4, scoped, tag = 'scoped memory for tpu_custom_call.1']
    #allocation12 [shape = 'u8[4096]{0}', space=vmem, size = 0x1000, scoped, tag = 'output window, operand 0, single buffered']
    %11 = vsyncpa [#allocation5], 0
    %s12 = scalar_lea.sflag [#allocation5], 1
    %13 = vsyncpa %s12, 0
    %14 = vsyncpa [#allocation8], 0
    %15 = vsyncpa [#allocation11], 0
    %16 = vsyncpa [#allocation6], 0
    loop: start=0, step=1, limit=4
    $region2: #{tpu_custom_call.1} parent=1 // loop_pre_header
      _
    $region3: #{tpu_custom_call.1} parent=1 // loop_header
      %s18 = sphi 0, %s22
      %p19 = scmp.ge.s32.totalorder %s18, 4
      %s28 = sphi 0, %s30
      %s31 = sphi 0, %s28
      %s32 = sphi 0, %s31
      %s48 = sphi 0, %s32
      %s52 = sphi 0, %s52
      %s54 = sphi 0, %s52
      %s55 = sphi 0, %s54
      %s69 = sphi 0, %s55
      %s73 = sphi 0, %s73
      %s75 = sphi 0, %s73
      %s76 = sphi 0, %s75
      %s90 = sphi 0, %s76
      %s94 = sphi 0, %s94
      %s96 = sphi 0, %s94
      %s97 = sphi 0, %s96
      %s111 = sphi 0, %s97
      %s115 = sphi 0, %s115
      %s117 = sphi 0, %s115
      %s118 = sphi 0, %s117
      %s132 = sphi 0, %s118
      %s136 = sphi 0, %s136
      %s138 = sphi 0, %s136
      %s139 = sphi 0, %s138
      %s153 = sphi 0, %s139
      %s157 = sphi 0, %s157
      %s159 = sphi 0, %s157
      %s160 = sphi 0, %s159
      %s174 = sphi 0, %s160
    $region4: #{tpu_custom_call.1} parent=1 // loop_header_branch
      %21 = sbr.rel (%p19) target = $region8
    $region5: #{tpu_custom_call.1} parent=1 // loop_body
      %s23 = ssub.s32 %s18, 1
      %s24 = ssub.s32 %s18, 2
      %s25 = sadd.s32 %s18, 1
      %s26 = ssub.s32 %s18, %s25
      %p27 = scmp.eq.s32.totalorder %s26, 0
      %s29 = sadd.s32 %s28, 1
      %s30 = scalar_select %p27, %s28, %s29
      %p33 = pneg %p27
      %p34 = scmp.eq.s32.totalorder %s18, 1
      %p35 = por %p33, %p34
      %p36 = scmp.ne.s32.totalorder %s28, %s31
      %p37 = scmp.eq.s32.totalorder %s18, 0
      %p38 = por %p36, %p37
      %p39 = scmp.ne.s32.totalorder %s28, %s31
      %p40 = scmp.eq.s32.totalorder %s23, 1
      %p41 = por %p39, %p40
      %p42 = scmp.ne.s32.totalorder %s31, %s32
      %p43 = scmp.eq.s32.totalorder %s23, 0
      %p44 = por %p42, %p43
      %p45 = scmp.ne.s32.totalorder %s31, %s32
      %p46 = scmp.eq.s32.totalorder %s24, 1
      %p47 = por %p45, %p46
      %p49 = scmp.ne.s32.totalorder %s32, %s48
      %p50 = scmp.eq.s32.totalorder %s24, 0
      %p51 = por %p49, %p50
      %s53 = sadd.s32 %s52, 1
      %p56 = scmp.eq.s32.totalorder %s18, 1
      %p57 = scmp.ne.s32.totalorder %s52, %s54
      %p58 = scmp.eq.s32.totalorder %s18, 0
      %p59 = por %p57, %p58
      %p60 = scmp.ne.s32.totalorder %s52, %s54
      %p61 = scmp.eq.s32.totalorder %s23, 1
      %p62 = por %p60, %p61
      %p63 = scmp.ne.s32.totalorder %s54, %s55
      %p64 = scmp.eq.s32.totalorder %s23, 0
      %p65 = por %p63, %p64
      %p66 = scmp.ne.s32.totalorder %s54, %s55
      %p67 = scmp.eq.s32.totalorder %s24, 1
      %p68 = por %p66, %p67
      %p70 = scmp.ne.s32.totalorder %s55, %s69
      %p71 = scmp.eq.s32.totalorder %s24, 0
      %p72 = por %p70, %p71
      %s74 = sadd.s32 %s73, 1
      %p77 = scmp.eq.s32.totalorder %s18, 1
      %p78 = scmp.ne.s32.totalorder %s73, %s75
      %p79 = scmp.eq.s32.totalorder %s18, 0
      %p80 = por %p78, %p79
      %p81 = scmp.ne.s32.totalorder %s73, %s75
      %p82 = scmp.eq.s32.totalorder %s23, 1
      %p83 = por %p81, %p82
      %p84 = scmp.ne.s32.totalorder %s75, %s76
      %p85 = scmp.eq.s32.totalorder %s23, 0
      %p86 = por %p84, %p85
      %p87 = scmp.ne.s32.totalorder %s75, %s76
      %p88 = scmp.eq.s32.totalorder %s24, 1
      %p89 = por %p87, %p88
      %p91 = scmp.ne.s32.totalorder %s76, %s90
      %p92 = scmp.eq.s32.totalorder %s24, 0
      %p93 = por %p91, %p92
      %s95 = sadd.s32 %s94, 1
      %p98 = scmp.eq.s32.totalorder %s18, 1
      %p99 = scmp.ne.s32.totalorder %s94, %s96
      %p100 = scmp.eq.s32.totalorder %s18, 0
      %p101 = por %p99, %p100
      %p102 = scmp.ne.s32.totalorder %s94, %s96
      %p103 = scmp.eq.s32.totalorder %s23, 1
      %p104 = por %p102, %p103
      %p105 = scmp.ne.s32.totalorder %s96, %s97
      %p106 = scmp.eq.s32.totalorder %s23, 0
      %p107 = por %p105, %p106
      %p108 = scmp.ne.s32.totalorder %s96, %s97
      %p109 = scmp.eq.s32.totalorder %s24, 1
      %p110 = por %p108, %p109
      %p112 = scmp.ne.s32.totalorder %s97, %s111
      %p113 = scmp.eq.s32.totalorder %s24, 0
      %p114 = por %p112, %p113
      %s116 = sadd.s32 %s115, 1
      %p119 = scmp.eq.s32.totalorder %s18, 1
      %p120 = scmp.ne.s32.totalorder %s115, %s117
      %p121 = scmp.eq.s32.totalorder %s18, 0
      %p122 = por %p120, %p121
      %p123 = scmp.ne.s32.totalorder %s115, %s117
      %p124 = scmp.eq.s32.totalorder %s23, 1
      %p125 = por %p123, %p124
      %p126 = scmp.ne.s32.totalorder %s117, %s118
      %p127 = scmp.eq.s32.totalorder %s23, 0
      %p128 = por %p126, %p127
      %p129 = scmp.ne.s32.totalorder %s117, %s118
      %p130 = scmp.eq.s32.totalorder %s24, 1
      %p131 = por %p129, %p130
      %p133 = scmp.ne.s32.totalorder %s118, %s132
      %p134 = scmp.eq.s32.totalorder %s24, 0
      %p135 = por %p133, %p134
      %s137 = sadd.s32 %s136, 1
      %p140 = scmp.eq.s32.totalorder %s18, 1
      %p141 = scmp.ne.s32.totalorder %s136, %s138
      %p142 = scmp.eq.s32.totalorder %s18, 0
      %p143 = por %p141, %p142
      %p144 = scmp.ne.s32.totalorder %s136, %s138
      %p145 = scmp.eq.s32.totalorder %s23, 1
      %p146 = por %p144, %p145
      %p147 = scmp.ne.s32.totalorder %s138, %s139
      %p148 = scmp.eq.s32.totalorder %s23, 0
      %p149 = por %p147, %p148
      %p150 = scmp.ne.s32.totalorder %s138, %s139
      %p151 = scmp.eq.s32.totalorder %s24, 1
      %p152 = por %p150, %p151
      %p154 = scmp.ne.s32.totalorder %s139, %s153
      %p155 = scmp.eq.s32.totalorder %s24, 0
      %p156 = por %p154, %p155
      %s158 = sadd.s32 %s157, 1
      %p161 = scmp.eq.s32.totalorder %s18, 1
      %p162 = scmp.ne.s32.totalorder %s157, %s159
      %p163 = scmp.eq.s32.totalorder %s18, 0
      %p164 = por %p162, %p163
      %p165 = scmp.ne.s32.totalorder %s157, %s159
      %p166 = scmp.eq.s32.totalorder %s23, 1
      %p167 = por %p165, %p166
      %p168 = scmp.ne.s32.totalorder %s159, %s160
      %p169 = scmp.eq.s32.totalorder %s23, 0
      %p170 = por %p168, %p169
      %p171 = scmp.ne.s32.totalorder %s159, %s160
      %p172 = scmp.eq.s32.totalorder %s24, 1
      %p173 = por %p171, %p172
      %p175 = scmp.ne.s32.totalorder %s160, %s174
      %p176 = scmp.eq.s32.totalorder %s24, 0
      %p177 = por %p175, %p176
      %p178 = scmp.le.s32.totalorder 1, %s18
      %p179 = scmp.lt.s32.totalorder %s18, 3
      %p180 = pnand %p178, %p179
      %p181 = pneg %p180
      // Predicated region
      $region9: #{tpu_custom_call.1} parent=5 // pred_check
        _
      $region10: #{tpu_custom_call.1} parent=5 // pred_check_branch
        %183 = sbr.rel (%p180) target = $region12
      $region11: #{tpu_custom_call.1} parent=5 // pred_region
        %s184 = ssub.s32 %s18, 1
        // Predicated region
        $region13: #{tpu_custom_call.1} parent=11 // pred_check
          %p185 = pneg %p65
        $region14: #{tpu_custom_call.1} parent=11 // pred_check_branch
          %187 = sbr.rel (%p185) target = $region16
        $region15: #{tpu_custom_call.1} parent=11 // pred_region
          %s189 = ssub.s32 1024, 1024
          %190 = vsyncadd [#allocation8], %s189
          %s191 = sshll.u32 [#allocation7], 4
          %s192 = int_to_ptr.vmem [resolvable:$true] %s191
          %197 = dma.hbm_to_vmem [thread:$0]  %s1, 1024, %s192, [#allocation8], 64, 64, 4
        $region16: #{tpu_custom_call.1} parent=11 // pred_fallthru
          _
        // Predicated region
        $region17: #{tpu_custom_call.1} parent=11 // pred_check
          %p198 = pneg %p86
        $region18: #{tpu_custom_call.1} parent=11 // pred_check_branch
          %200 = sbr.rel (%p198) target = $region20
        $region19: #{tpu_custom_call.1} parent=11 // pred_region
          %s202 = ssub.s32 1024, 1024
          %203 = vsyncadd [#allocation8], %s202
          %s204 = sshll.u32 [#allocation9], 4
          %s205 = int_to_ptr.vmem [resolvable:$true] %s204
          %210 = dma.hbm_to_vmem [thread:$0]  %s2, 1024, %s205, [#allocation8], 64, 64, 4
        $region20: #{tpu_custom_call.1} parent=11 // pred_fallthru
          _
        // Predicated region
        $region21: #{tpu_custom_call.1} parent=11 // pred_check
          %p211 = pneg %p107
        $region22: #{tpu_custom_call.1} parent=11 // pred_check_branch
          %213 = sbr.rel (%p211) target = $region24
        $region23: #{tpu_custom_call.1} parent=11 // pred_region
          _
        $region24: #{tpu_custom_call.1} parent=11 // pred_fallthru
          _
        // Predicated region
        $region25: #{tpu_custom_call.1} parent=11 // pred_check
          %p214 = pneg %p128
        $region26: #{tpu_custom_call.1} parent=11 // pred_check_branch
          %216 = sbr.rel (%p214) target = $region28
        $region27: #{tpu_custom_call.1} parent=11 // pred_region
          %s218 = ssub.s32 1024, 1024
          %219 = vsyncadd [#allocation11], %s218
          %s220 = sshll.u32 [#allocation10], 4
          %s221 = int_to_ptr.vmem [resolvable:$true] %s220
          %226 = dma.hbm_to_vmem [thread:$0]  %s4, 1024, %s221, [#allocation11], 64, 64, 4
        $region28: #{tpu_custom_call.1} parent=11 // pred_fallthru
          _
        // Predicated region
        $region29: #{tpu_custom_call.1} parent=11 // pred_check
          %p227 = pneg %p149
        $region30: #{tpu_custom_call.1} parent=11 // pred_check_branch
          %229 = sbr.rel (%p227) target = $region32
        $region31: #{tpu_custom_call.1} parent=11 // pred_region
          _
        $region32: #{tpu_custom_call.1} parent=11 // pred_fallthru
          _
      $region12: #{tpu_custom_call.1} parent=5 // pred_fallthru
        _
      %p230 = scmp.lt.s32.totalorder %s18, 2
      // Predicated region
      $region33: #{tpu_custom_call.1} parent=5 // pred_check
        %p231 = pneg %p230
      $region34: #{tpu_custom_call.1} parent=5 // pred_check_branch
        %233 = sbr.rel (%p231) target = $region36
      $region35: #{tpu_custom_call.1} parent=5 // pred_region
        // Predicated region
        $region37: #{tpu_custom_call.1} parent=35 // pred_check
          %p234 = pneg %p38
        $region38: #{tpu_custom_call.1} parent=35 // pred_check_branch
          %236 = sbr.rel (%p234) target = $region40
        $region39: #{tpu_custom_call.1} parent=35 // pred_region
          %s237 = sand.u32 %s28, 1
          %s238 = scalar_lea.sflag [#allocation5], %s237
          %s239 = sand.u32 %s28, 1
          %s240 = smul.addr %s239, 16
          %s241 = scalar_lea.vmem [#allocation4], %s240
          %s242 = smul.u32 4, %s18
          %s244 = ssub.s32 256, 256
          %245 = vsyncadd %s238, %s244
          %s246 = smul.addr %s242, 64
          %s247 = scalar_lea.hbm %s0, %s246
          %s248 = sshll.u32 %s241, 4
          %s249 = int_to_ptr.vmem [resolvable:$true] %s248
          %254 = dma.hbm_to_vmem [thread:$0]  %s247, 256, %s249, %s238, 64, 64, 4
        $region40: #{tpu_custom_call.1} parent=35 // pred_fallthru
          _
      $region36: #{tpu_custom_call.1} parent=5 // pred_fallthru
        _
      %p255 = scmp.le.s32.totalorder 1, %s18
      %p256 = scmp.lt.s32.totalorder %s18, 3
      %p257 = pnand %p255, %p256
      %p258 = pneg %p257
      // Predicated region
      $region41: #{tpu_custom_call.1} parent=5 // pred_check
        _
      $region42: #{tpu_custom_call.1} parent=5 // pred_check_branch
        %260 = sbr.rel (%p257) target = $region44
      $region43: #{tpu_custom_call.1} parent=5 // pred_region
        %s261 = ssub.s32 %s18, 1
        %s262 = sand.u32 %s31, 1
        %s263 = scalar_lea.sflag [#allocation5], %s262
        %s264 = sand.u32 %s31, 1
        %s265 = smul.addr %s264, 16
        %s266 = scalar_lea.vmem [#allocation4], %s265
        // Predicated region
        $region45: #{tpu_custom_call.1} parent=43 // pred_check
          %p267 = pneg %p44
        $region46: #{tpu_custom_call.1} parent=43 // pred_check_branch
          %269 = sbr.rel (%p267) target = $region48
        $region47: #{tpu_custom_call.1} parent=43 // pred_region
          %270 = dma.done %s263, 256
        $region48: #{tpu_custom_call.1} parent=43 // pred_fallthru
          _
        // Predicated region
        $region49: #{tpu_custom_call.1} parent=43 // pred_check
          %p271 = pneg %p65
        $region50: #{tpu_custom_call.1} parent=43 // pred_check_branch
          %273 = sbr.rel (%p271) target = $region52
        $region51: #{tpu_custom_call.1} parent=43 // pred_region
          %274 = dma.done [#allocation8], 1024
        $region52: #{tpu_custom_call.1} parent=43 // pred_fallthru
          _
        // Predicated region
        $region53: #{tpu_custom_call.1} parent=43 // pred_check
          %p275 = pneg %p86
        $region54: #{tpu_custom_call.1} parent=43 // pred_check_branch
          %277 = sbr.rel (%p275) target = $region56
        $region55: #{tpu_custom_call.1} parent=43 // pred_region
          %278 = dma.done [#allocation8], 1024
        $region56: #{tpu_custom_call.1} parent=43 // pred_fallthru
          _
        // Predicated region
        $region57: #{tpu_custom_call.1} parent=43 // pred_check
          %p279 = pneg %p128
        $region58: #{tpu_custom_call.1} parent=43 // pred_check_branch
          %281 = sbr.rel (%p279) target = $region60
        $region59: #{tpu_custom_call.1} parent=43 // pred_region
          %282 = dma.done [#allocation11], 1024
        $region60: #{tpu_custom_call.1} parent=43 // pred_fallthru
          _
        %s283 = sand.u32 %s31, 1
        %s284 = scalar_lea.sflag [#allocation5], %s283
        %s285 = sand.u32 %s31, 1
        %s286 = smul.addr %s285, 16
        %s287 = scalar_lea.vmem [#allocation4], %s286
        %p288 = pneg %p44
        %p289 = pneg %p41
        %p290 = pneg %p65
        %p291 = pneg %p62
        %p292 = pneg %p86
        %p293 = pneg %p83
        %p294 = pneg %p107
        %p295 = pneg %p104
        %p296 = pneg %p128
        %p297 = pneg %p125
        %p298 = pneg %p149
        %p299 = pneg %p146
        %p300 = pneg %p170
        %p301 = pneg %p167
        %s302 = smul.u32 4, %s23
        %p304 = scmp.eq.s32.totalorder %s23, 0
        // Predicated region
        $region61: #{tpu_custom_call.1} parent=43 // pred_check
          %p305 = pneg %p304
        $region62: #{tpu_custom_call.1} parent=43 // pred_check_branch
          %307 = sbr.rel (%p305) target = $region64
        $region63: #{tpu_custom_call.1} parent=43 // pred_region
          %308 = vst [vmem:[#allocation3] sm:$0xff] 0.0
        $region64: #{tpu_custom_call.1} parent=43 // pred_fallthru
          _
        %v309 = vld [vmem:[%s266] sm:$0xf]
        %v310 = vld [vmem:[%s266 + $0x4] sm:$0xf]
        %v311 = vld [vmem:[%s266 + $0x8] sm:$0xf]
        %v312 = vld [vmem:[%s266 + $0xc] sm:$0xf]
        %v313 = vld [vmem:[#allocation7] sm:$0xf]
        %v314 = vld [vmem:[#allocation7 + $0x4] sm:$0xf]
        %v315 = vld [vmem:[#allocation7 + $0x8] sm:$0xf]
        %v316 = vld [vmem:[#allocation7 + $0xc] sm:$0xf]
        %v317 = vld [vmem:[#allocation7 + $0x10] sm:$0xf]
        %v318 = vld [vmem:[#allocation7 + $0x14] sm:$0xf]
        %v319 = vld [vmem:[#allocation7 + $0x18] sm:$0xf]
        %v320 = vld [vmem:[#allocation7 + $0x1c] sm:$0xf]
        %v321 = vld [vmem:[#allocation7 + $0x20] sm:$0xf]
        %v322 = vld [vmem:[#allocation7 + $0x24] sm:$0xf]
        %v323 = vld [vmem:[#allocation7 + $0x28] sm:$0xf]
        %v324 = vld [vmem:[#allocation7 + $0x2c] sm:$0xf]
        %v325 = vld [vmem:[#allocation7 + $0x30] sm:$0xf]
        %v326 = vld [vmem:[#allocation7 + $0x34] sm:$0xf]
        %v327 = vld [vmem:[#allocation7 + $0x38] sm:$0xf]
        %v328 = vld [vmem:[#allocation7 + $0x3c] sm:$0xf]
        %v329 = vld [vmem:[%s3] sm:$0x1]
        %v331 = vlaneseq
        %v332 = vshrl.u32 %v331, 7
        %v333 = vsub.s32 0, %v332
        %v334 = vrot.slane %v329, %v333
        %v340 = vunpack.c.l.b16 %v309
        %v341 = vunpack.c.l.b16 %v310
        %v342 = vunpack.c.l.b16 %v311
        %v343 = vunpack.c.l.b16 %v312
        %v344 = vpack.c.b16 %v341, %v340
        %v345 = vpack.c.b16 %v343, %v342
        %v364 = vunpack.c.l.b16 %v313
        %v365 = vunpack.c.l.b16 %v314
        %v366 = vunpack.c.l.b16 %v315
        %v367 = vunpack.c.l.b16 %v316
        %v368 = vunpack.c.l.b16 %v317
        %v369 = vunpack.c.l.b16 %v318
        %v370 = vunpack.c.l.b16 %v319
        %v371 = vunpack.c.l.b16 %v320
        %v372 = vunpack.c.l.b16 %v321
        %v373 = vunpack.c.l.b16 %v322
        %v374 = vunpack.c.l.b16 %v323
        %v375 = vunpack.c.l.b16 %v324
        %v376 = vunpack.c.l.b16 %v325
        %v377 = vunpack.c.l.b16 %v326
        %v378 = vunpack.c.l.b16 %v327
        %v379 = vunpack.c.l.b16 %v328
        %v380 = vpack.c.b16 %v365, %v364
        %v381 = vpack.c.b16 %v367, %v366
        %v382 = vpack.c.b16 %v369, %v368
        %v383 = vpack.c.b16 %v371, %v370
        %v384 = vpack.c.b16 %v373, %v372
        %v385 = vpack.c.b16 %v375, %v374
        %v386 = vpack.c.b16 %v377, %v376
        %v387 = vpack.c.b16 %v379, %v378
        %396 = vmatprep.subr.bf16.mxu0 0
        %397 = vmatpush1.bf16.msra.mxu0 %v380
        %398 = vmatprep.subr.bf16.mxu0 0
        %399 = vmatpush1.bf16.msra.mxu0 %v381
        %400 = vmatprep.subr.bf16.mxu0 0
        %401 = vmatpush1.bf16.msra.mxu0 %v382
        %402 = vmatprep.subr.bf16.mxu0 0
        %403 = vmatpush1.bf16.msra.mxu0 %v383
        %404 = vmatprep.subr.bf16.mxu0 0
        %405 = vmatpush1.bf16.msra.mxu0 %v384
        %406 = vmatprep.subr.bf16.mxu0 0
        %407 = vmatpush1.bf16.msra.mxu0 %v385
        %408 = vmatprep.subr.bf16.mxu0 0
        %409 = vmatpush1.bf16.msra.mxu0 %v386
        %410 = vmatprep.subr.bf16.mxu0 0
        %411 = vmatpush1.bf16.msra.mxu0 %v387
        %412 = vmatprep.subr.bf16.mxu0 0
        %413 = vmatpush1.bf16.msra.mxu0 0
        %414 = vmatprep.subr.bf16.mxu0 0
        %415 = vmatpush1.bf16.msra.mxu0 0
        %416 = vmatprep.subr.bf16.mxu0 0
        %417 = vmatpush1.bf16.msra.mxu0 0
        %418 = vmatprep.subr.bf16.mxu0 0
        %419 = vmatpush1.bf16.msra.mxu0 0
        %420 = vmatprep.subr.bf16.mxu0 0
        %421 = vmatpush1.bf16.msra.mxu0 0
        %422 = vmatprep.subr.bf16.mxu0 0
        %423 = vmatpush1.bf16.msra.mxu0 0
        %424 = vmatprep.subr.bf16.mxu0 0
        %425 = vmatpush1.bf16.msra.mxu0 0
        %426 = vmatprep.subr.bf16.mxu0 0
        %427 = vmatpush1.bf16.msra.mxu0 0
        %428 = vmatprep.mubr.bf16.mxu0 0
        %429 = vmatmul.mubr.bf16.gmra.mrb[0].mxu0 %v344
        %v430 = vpop.f32.mrb[0].mxu0
        %v431 = vadd.f32 %v334, %v430
        %v432 = vpop.f32.mrb[0].mxu0
        %v433 = vpop.f32.mrb[0].mxu0
        %v434 = vadd.f32 %v334, %v433
        %v435 = vpop.f32.mrb[0].mxu0
        %436 = vmatprep.mubr.bf16.mxu0 0
        %437 = vmatmul.mubr.bf16.gmra.mrb[0].mxu0 %v345
        %v438 = vpop.f32.mrb[0].mxu0
        %v439 = vadd.f32 %v334, %v438
        %v440 = vpop.f32.mrb[0].mxu0
        %v441 = vpop.f32.mrb[0].mxu0
        %v442 = vadd.f32 %v334, %v441
        %v443 = vpop.f32.mrb[0].mxu0
        %444 = vdwg.mxu0
        %445 = vst [vmem:[#allocation2] sm:$0xff] %v431
        %446 = vst [vmem:[#allocation2 + $0x8] sm:$0xff] %v434
        %447 = vst [vmem:[#allocation2 + $0x10] sm:$0xff] %v439
        %448 = vst [vmem:[#allocation2 + $0x18] sm:$0xff] %v442
        %v449 = vld [vmem:[#allocation9] sm:$0xf]
        %v450 = vld [vmem:[#allocation9 + $0x4] sm:$0xf]
        %v451 = vld [vmem:[#allocation9 + $0x8] sm:$0xf]
        %v452 = vld [vmem:[#allocation9 + $0xc] sm:$0xf]
        %v453 = vld [vmem:[#allocation9 + $0x10] sm:$0xf]
        %v454 = vld [vmem:[#allocation9 + $0x14] sm:$0xf]
        %v455 = vld [vmem:[#allocation9 + $0x18] sm:$0xf]
        %v456 = vld [vmem:[#allocation9 + $0x1c] sm:$0xf]
        %v457 = vld [vmem:[#allocation9 + $0x20] sm:$0xf]
        %v458 = vld [vmem:[#allocation9 + $0x24] sm:$0xf]
        %v459 = vld [vmem:[#allocation9 + $0x28] sm:$0xf]
        %v460 = vld [vmem:[#allocation9 + $0x2c] sm:$0xf]
        %v461 = vld [vmem:[#allocation9 + $0x30] sm:$0xf]
        %v462 = vld [vmem:[#allocation9 + $0x34] sm:$0xf]
        %v463 = vld [vmem:[#allocation9 + $0x38] sm:$0xf]
        %v464 = vld [vmem:[#allocation9 + $0x3c] sm:$0xf]
        %v465 = vld [vmem:[#allocation3] sm:$0xff]
        %v466 = vld [vmem:[#allocation2] sm:$0xff]
        %v467 = vpack.c.bf16 %v465, %v465
        %v484 = vunpack.c.l.b16 %v449
        %v485 = vunpack.c.l.b16 %v450
        %v486 = vunpack.c.l.b16 %v451
        %v487 = vunpack.c.l.b16 %v452
        %v488 = vunpack.c.l.b16 %v453
        %v489 = vunpack.c.l.b16 %v454
        %v490 = vunpack.c.l.b16 %v455
        %v491 = vunpack.c.l.b16 %v456
        %v492 = vunpack.c.l.b16 %v457
        %v493 = vunpack.c.l.b16 %v458
        %v494 = vunpack.c.l.b16 %v459
        %v495 = vunpack.c.l.b16 %v460
        %v496 = vunpack.c.l.b16 %v461
        %v497 = vunpack.c.l.b16 %v462
        %v498 = vunpack.c.l.b16 %v463
        %v499 = vunpack.c.l.b16 %v464
        %v500 = vpack.c.b16 %v485, %v484
        %v501 = vpack.c.b16 %v487, %v486
        %v502 = vpack.c.b16 %v489, %v488
        %v503 = vpack.c.b16 %v491, %v490
        %v504 = vpack.c.b16 %v493, %v492
        %v505 = vpack.c.b16 %v495, %v494
        %v506 = vpack.c.b16 %v497, %v496
        %v507 = vpack.c.b16 %v499, %v498
        %516 = vmatprep.subr.bf16.mxu0 0
        %517 = vmatpush1.bf16.msra.mxu0 %v500
        %518 = vmatprep.subr.bf16.mxu0 0
        %519 = vmatpush1.bf16.msra.mxu0 %v501
        %520 = vmatprep.subr.bf16.mxu0 0
        %521 = vmatpush1.bf16.msra.mxu0 %v502
        %522 = vmatprep.subr.bf16.mxu0 0
        %523 = vmatpush1.bf16.msra.mxu0 %v503
        %524 = vmatprep.subr.bf16.mxu0 0
        %525 = vmatpush1.bf16.msra.mxu0 %v504
        %526 = vmatprep.subr.bf16.mxu0 0
        %527 = vmatpush1.bf16.msra.mxu0 %v505
        %528 = vmatprep.subr.bf16.mxu0 0
        %529 = vmatpush1.bf16.msra.mxu0 %v506
        %530 = vmatprep.subr.bf16.mxu0 0
        %531 = vmatpush1.bf16.msra.mxu0 %v507
        %532 = vmatprep.subr.bf16.mxu0 0
        %533 = vmatpush1.bf16.msra.mxu0 0
        %534 = vmatprep.subr.bf16.mxu0 0
        %535 = vmatpush1.bf16.msra.mxu0 0
        %536 = vmatprep.subr.bf16.mxu0 0
        %537 = vmatpush1.bf16.msra.mxu0 0
        %538 = vmatprep.subr.bf16.mxu0 0
        %539 = vmatpush1.bf16.msra.mxu0 0
        %540 = vmatprep.subr.bf16.mxu0 0
        %541 = vmatpush1.bf16.msra.mxu0 0
        %542 = vmatprep.subr.bf16.mxu0 0
        %543 = vmatpush1.bf16.msra.mxu0 0
        %544 = vmatprep.subr.bf16.mxu0 0
        %545 = vmatpush1.bf16.msra.mxu0 0
        %546 = vmatprep.subr.bf16.mxu0 0
        %547 = vmatpush1.bf16.msra.mxu0 0
        %548 = vmatprep.mubr.bf16.mxu0 0
        %549 = vmatmul.mubr.bf16.gmra.mrb[0].mxu0 %v467
        %v550 = vpop.f32.mrb[0].mxu0
        %v551 = vadd.f32 0.0, %v550
        %v552 = vpop.f32.mrb[0].mxu0
        %v553 = vpop.f32.mrb[0].mxu0
        %v554 = vpop.f32.mrb[0].mxu0
        %555 = vdwg.mxu0
        %v556 = vadd.f32 %v466, %v551
        %v557 = vtanh.pop %v556
        %v558 = vld [vmem:[#allocation2 + $0x8] sm:$0xff]
        %v559 = vpack.c.bf16 %v557, %v557
        %560 = vmatprep.subr.bf16.mxu0 0
        %561 = vmatpush1.bf16.msra.mxu0 %v500
        %562 = vmatprep.subr.bf16.mxu0 0
        %563 = vmatpush1.bf16.msra.mxu0 %v501
        %564 = vmatprep.subr.bf16.mxu0 0
        %565 = vmatpush1.bf16.msra.mxu0 %v502
        %566 = vmatprep.subr.bf16.mxu0 0
        %567 = vmatpush1.bf16.msra.mxu0 %v503
        %568 = vmatprep.subr.bf16.mxu0 0
        %569 = vmatpush1.bf16.msra.mxu0 %v504
        %570 = vmatprep.subr.bf16.mxu0 0
        %571 = vmatpush1.bf16.msra.mxu0 %v505
        %572 = vmatprep.subr.bf16.mxu0 0
        %573 = vmatpush1.bf16.msra.mxu0 %v506
        %574 = vmatprep.subr.bf16.mxu0 0
        %575 = vmatpush1.bf16.msra.mxu0 %v507
        %576 = vmatprep.subr.bf16.mxu0 0
        %577 = vmatpush1.bf16.msra.mxu0 0
        %578 = vmatprep.subr.bf16.mxu0 0
        %579 = vmatpush1.bf16.msra.mxu0 0
        %580 = vmatprep.subr.bf16.mxu0 0
        %581 = vmatpush1.bf16.msra.mxu0 0
        %582 = vmatprep.subr.bf16.mxu0 0
        %583 = vmatpush1.bf16.msra.mxu0 0
        %584 = vmatprep.subr.bf16.mxu0 0
        %585 = vmatpush1.bf16.msra.mxu0 0
        %586 = vmatprep.subr.bf16.mxu0 0
        %587 = vmatpush1.bf16.msra.mxu0 0
        %588 = vmatprep.subr.bf16.mxu0 0
        %589 = vmatpush1.bf16.msra.mxu0 0
        %590 = vmatprep.subr.bf16.mxu0 0
        %591 = vmatpush1.bf16.msra.mxu0 0
        %592 = vmatprep.mubr.bf16.mxu0 0
        %593 = vmatmul.mubr.bf16.gmra.mrb[0].mxu0 %v559
        %v594 = vpop.f32.mrb[0].mxu0
        %v595 = vadd.f32 0.0, %v594
        %v596 = vpop.f32.mrb[0].mxu0
        %v597 = vpop.f32.mrb[0].mxu0
        %v598 = vpop.f32.mrb[0].mxu0
        %599 = vdwg.mxu0
        %v600 = vadd.f32 %v558, %v595
        %v601 = vtanh.pop %v600
        %v602 = vld [vmem:[#allocation2 + $0x10] sm:$0xff]
        %v603 = vpack.c.bf16 %v601, %v601
        %604 = vmatprep.subr.bf16.mxu0 0
        %605 = vmatpush1.bf16.msra.mxu0 %v500
        %606 = vmatprep.subr.bf16.mxu0 0
        %607 = vmatpush1.bf16.msra.mxu0 %v501
        %608 = vmatprep.subr.bf16.mxu0 0
        %609 = vmatpush1.bf16.msra.mxu0 %v502
        %610 = vmatprep.subr.bf16.mxu0 0
        %611 = vmatpush1.bf16.msra.mxu0 %v503
        %612 = vmatprep.subr.bf16.mxu0 0
        %613 = vmatpush1.bf16.msra.mxu0 %v504
        %614 = vmatprep.subr.bf16.mxu0 0
        %615 = vmatpush1.bf16.msra.mxu0 %v505
        %616 = vmatprep.subr.bf16.mxu0 0
        %617 = vmatpush1.bf16.msra.mxu0 %v506
        %618 = vmatprep.subr.bf16.mxu0 0
        %619 = vmatpush1.bf16.msra.mxu0 %v507
        %620 = vmatprep.subr.bf16.mxu0 0
        %621 = vmatpush1.bf16.msra.mxu0 0
        %622 = vmatprep.subr.bf16.mxu0 0
        %623 = vmatpush1.bf16.msra.mxu0 0
        %624 = vmatprep.subr.bf16.mxu0 0
        %625 = vmatpush1.bf16.msra.mxu0 0
        %626 = vmatprep.subr.bf16.mxu0 0
        %627 = vmatpush1.bf16.msra.mxu0 0
        %628 = vmatprep.subr.bf16.mxu0 0
        %629 = vmatpush1.bf16.msra.mxu0 0
        %630 = vmatprep.subr.bf16.mxu0 0
        %631 = vmatpush1.bf16.msra.mxu0 0
        %632 = vmatprep.subr.bf16.mxu0 0
        %633 = vmatpush1.bf16.msra.mxu0 0
        %634 = vmatprep.subr.bf16.mxu0 0
        %635 = vmatpush1.bf16.msra.mxu0 0
        %636 = vmatprep.mubr.bf16.mxu0 0
        %637 = vmatmul.mubr.bf16.gmra.mrb[0].mxu0 %v603
        %v638 = vpop.f32.mrb[0].mxu0
        %v639 = vadd.f32 0.0, %v638
        %v640 = vpop.f32.mrb[0].mxu0
        %v641 = vpop.f32.mrb[0].mxu0
        %v642 = vpop.f32.mrb[0].mxu0
        %643 = vdwg.mxu0
        %v644 = vadd.f32 %v602, %v639
        %v645 = vtanh.pop %v644
        %v646 = vld [vmem:[#allocation2 + $0x18] sm:$0xff]
        %v647 = vpack.c.bf16 %v645, %v645
        %648 = vmatprep.subr.bf16.mxu0 0
        %649 = vmatpush1.bf16.msra.mxu0 %v500
        %650 = vmatprep.subr.bf16.mxu0 0
        %651 = vmatpush1.bf16.msra.mxu0 %v501
        %652 = vmatprep.subr.bf16.mxu0 0
        %653 = vmatpush1.bf16.msra.mxu0 %v502
        %654 = vmatprep.subr.bf16.mxu0 0
        %655 = vmatpush1.bf16.msra.mxu0 %v503
        %656 = vmatprep.subr.bf16.mxu0 0
        %657 = vmatpush1.bf16.msra.mxu0 %v504
        %658 = vmatprep.subr.bf16.mxu0 0
        %659 = vmatpush1.bf16.msra.mxu0 %v505
        %660 = vmatprep.subr.bf16.mxu0 0
        %661 = vmatpush1.bf16.msra.mxu0 %v506
        %662 = vmatprep.subr.bf16.mxu0 0
        %663 = vmatpush1.bf16.msra.mxu0 %v507
        %664 = vmatprep.subr.bf16.mxu0 0
        %665 = vmatpush1.bf16.msra.mxu0 0
        %666 = vmatprep.subr.bf16.mxu0 0
        %667 = vmatpush1.bf16.msra.mxu0 0
        %668 = vmatprep.subr.bf16.mxu0 0
        %669 = vmatpush1.bf16.msra.mxu0 0
        %670 = vmatprep.subr.bf16.mxu0 0
        %671 = vmatpush1.bf16.msra.mxu0 0
        %672 = vmatprep.subr.bf16.mxu0 0
        %673 = vmatpush1.bf16.msra.mxu0 0
        %674 = vmatprep.subr.bf16.mxu0 0
        %675 = vmatpush1.bf16.msra.mxu0 0
        %676 = vmatprep.subr.bf16.mxu0 0
        %677 = vmatpush1.bf16.msra.mxu0 0
        %678 = vmatprep.subr.bf16.mxu0 0
        %679 = vmatpush1.bf16.msra.mxu0 0
        %680 = vmatprep.mubr.bf16.mxu0 0
        %681 = vmatmul.mubr.bf16.gmra.mrb[0].mxu0 %v647
        %v682 = vpop.f32.mrb[0].mxu0
        %v683 = vadd.f32 0.0, %v682
        %v684 = vpop.f32.mrb[0].mxu0
        %v685 = vpop.f32.mrb[0].mxu0
        %v686 = vpop.f32.mrb[0].mxu0
        %687 = vdwg.mxu0
        %v688 = vadd.f32 %v646, %v683
        %v689 = vtanh.pop %v688
        %690 = vst [vmem:[#allocation3] sm:$0xff] %v689
        %p691 = scmp.eq.s32.totalorder %s23, 1
        // Predicated region
        $region65: #{tpu_custom_call.1} parent=43 // pred_check
          %p692 = pneg %p691
        $region66: #{tpu_custom_call.1} parent=43 // pred_check_branch
          %694 = sbr.rel (%p692) target = $region68
        $region67: #{tpu_custom_call.1} parent=43 // pred_region
          %v695 = vpack.c.bf16 %v689, %v689
          %v696 = vld [vmem:[#allocation10] sm:$0xf]
          %v697 = vld [vmem:[#allocation10 + $0x4] sm:$0xf]
          %v698 = vld [vmem:[#allocation10 + $0x8] sm:$0xf]
          %v699 = vld [vmem:[#allocation10 + $0xc] sm:$0xf]
          %v700 = vld [vmem:[#allocation10 + $0x10] sm:$0xf]
          %v701 = vld [vmem:[#allocation10 + $0x14] sm:$0xf]
          %v702 = vld [vmem:[#allocation10 + $0x18] sm:$0xf]
          %v703 = vld [vmem:[#allocation10 + $0x1c] sm:$0xf]
          %v704 = vld [vmem:[#allocation10 + $0x20] sm:$0xf]
          %v705 = vld [vmem:[#allocation10 + $0x24] sm:$0xf]
          %v706 = vld [vmem:[#allocation10 + $0x28] sm:$0xf]
          %v707 = vld [vmem:[#allocation10 + $0x2c] sm:$0xf]
          %v708 = vld [vmem:[#allocation10 + $0x30] sm:$0xf]
          %v709 = vld [vmem:[#allocation10 + $0x34] sm:$0xf]
          %v710 = vld [vmem:[#allocation10 + $0x38] sm:$0xf]
          %v711 = vld [vmem:[#allocation10 + $0x3c] sm:$0xf]
          %v712 = vld [vmem:[%s5] sm:$0x1]
          %v714 = vlaneseq
          %v715 = vshrl.u32 %v714, 7
          %v716 = vsub.s32 0, %v715
          %v717 = vrot.slane %v712, %v716
          %v735 = vunpack.c.l.b16 %v696
          %v736 = vunpack.c.l.b16 %v697
          %v737 = vunpack.c.l.b16 %v698
          %v738 = vunpack.c.l.b16 %v699
          %v739 = vunpack.c.l.b16 %v700
          %v740 = vunpack.c.l.b16 %v701
          %v741 = vunpack.c.l.b16 %v702
          %v742 = vunpack.c.l.b16 %v703
          %v743 = vunpack.c.l.b16 %v704
          %v744 = vunpack.c.l.b16 %v705
          %v745 = vunpack.c.l.b16 %v706
          %v746 = vunpack.c.l.b16 %v707
          %v747 = vunpack.c.l.b16 %v708
          %v748 = vunpack.c.l.b16 %v709
          %v749 = vunpack.c.l.b16 %v710
          %v750 = vunpack.c.l.b16 %v711
          %v751 = vpack.c.b16 %v736, %v735
          %v752 = vpack.c.b16 %v738, %v737
          %v753 = vpack.c.b16 %v740, %v739
          %v754 = vpack.c.b16 %v742, %v741
          %v755 = vpack.c.b16 %v744, %v743
          %v756 = vpack.c.b16 %v746, %v745
          %v757 = vpack.c.b16 %v748, %v747
          %v758 = vpack.c.b16 %v750, %v749
          %767 = vmatprep.subr.bf16.mxu0 0
          %768 = vmatpush1.bf16.msra.mxu0 %v751
          %769 = vmatprep.subr.bf16.mxu0 0
          %770 = vmatpush1.bf16.msra.mxu0 %v752
          %771 = vmatprep.subr.bf16.mxu0 0
          %772 = vmatpush1.bf16.msra.mxu0 %v753
          %773 = vmatprep.subr.bf16.mxu0 0
          %774 = vmatpush1.bf16.msra.mxu0 %v754
          %775 = vmatprep.subr.bf16.mxu0 0
          %776 = vmatpush1.bf16.msra.mxu0 %v755
          %777 = vmatprep.subr.bf16.mxu0 0
          %778 = vmatpush1.bf16.msra.mxu0 %v756
          %779 = vmatprep.subr.bf16.mxu0 0
          %780 = vmatpush1.bf16.msra.mxu0 %v757
          %781 = vmatprep.subr.bf16.mxu0 0
          %782 = vmatpush1.bf16.msra.mxu0 %v758
          %783 = vmatprep.subr.bf16.mxu0 0
          %784 = vmatpush1.bf16.msra.mxu0 0
          %785 = vmatprep.subr.bf16.mxu0 0
          %786 = vmatpush1.bf16.msra.mxu0 0
          %787 = vmatprep.subr.bf16.mxu0 0
          %788 = vmatpush1.bf16.msra.mxu0 0
          %789 = vmatprep.subr.bf16.mxu0 0
          %790 = vmatpush1.bf16.msra.mxu0 0
          %791 = vmatprep.subr.bf16.mxu0 0
          %792 = vmatpush1.bf16.msra.mxu0 0
          %793 = vmatprep.subr.bf16.mxu0 0
          %794 = vmatpush1.bf16.msra.mxu0 0
          %795 = vmatprep.subr.bf16.mxu0 0
          %796 = vmatpush1.bf16.msra.mxu0 0
          %797 = vmatprep.subr.bf16.mxu0 0
          %798 = vmatpush1.bf16.msra.mxu0 0
          %799 = vmatprep.mubr.bf16.mxu0 0
          %800 = vmatmul.mubr.bf16.gmra.mrb[0].mxu0 %v695
          %v801 = vpop.f32.mrb[0].mxu0
          %v802 = vadd.f32 %v717, %v801
          %v803 = vpop.f32.mrb[0].mxu0
          %v804 = vpop.f32.mrb[0].mxu0
          %v805 = vpop.f32.mrb[0].mxu0
          %806 = vdwg.mxu0
          %807 = vst [vmem:[#allocation12] sm:$0xff] %v802
        $region68: #{tpu_custom_call.1} parent=43 // pred_fallthru
          _
        // Predicated region
        $region69: #{tpu_custom_call.1} parent=43 // pred_check
          %p808 = pneg %p167
        $region70: #{tpu_custom_call.1} parent=43 // pred_check_branch
          %810 = sbr.rel (%p808) target = $region72
        $region71: #{tpu_custom_call.1} parent=43 // pred_region
          %s812 = ssub.s32 128, 128
          %813 = vsyncadd [#allocation6], %s812
          %s815 = sshll.u32 [#allocation12], 4
          %s816 = int_to_ptr.vmem [resolvable:$true] %s815
          %818 = dma.vmem_to_hbm [thread:$0]  %s816, 128, %s6, [#allocation6]
        $region72: #{tpu_custom_call.1} parent=43 // pred_fallthru
          _
        // Predicated region
        $region73: #{tpu_custom_call.1} parent=43 // pred_check
          %p819 = pneg %p167
        $region74: #{tpu_custom_call.1} parent=43 // pred_check_branch
          %821 = sbr.rel (%p819) target = $region76
        $region75: #{tpu_custom_call.1} parent=43 // pred_region
          %822 = dma.done [#allocation6], 128
        $region76: #{tpu_custom_call.1} parent=43 // pred_fallthru
          _
      $region44: #{tpu_custom_call.1} parent=5 // pred_fallthru
        _
      %p823 = scmp.le.s32.totalorder 2, %s18
      // Predicated region
      $region77: #{tpu_custom_call.1} parent=5 // pred_check
        %p824 = pneg %p823
      $region78: #{tpu_custom_call.1} parent=5 // pred_check_branch
        %826 = sbr.rel (%p824) target = $region80
      $region79: #{tpu_custom_call.1} parent=5 // pred_region
        %s827 = ssub.s32 %s18, 2
      $region80: #{tpu_custom_call.1} parent=5 // pred_fallthru
        _
    $region6: #{tpu_custom_call.1} parent=1 // loop_footer
      %s22 = sadd.s32 1, %s18
    $region7: #{tpu_custom_call.1} parent=1 // loop_footer_branch
      %17 = sbr.rel target = $region3
    $region8: #{tpu_custom_call.1} parent=1 // loop_exit
      _
    %828 = vsyncpa [#allocation5], 1
    %s829 = scalar_lea.sflag [#allocation5], 1
    %830 = vsyncpa %s829, 1
    %831 = vsyncpa [#allocation8], 1
    %832 = vsyncpa [#allocation11], 1
    %833 = vsyncpa [#allocation6], 1
    %s834 = scalar_lea.sflag [#allocation6], 1
    %835 = vsyncpa %s834, 1

</llo_original>
